<compile_context>
chip_gen: v5e
topology: v5e:2x2
jax: 0.10.0
libtpu: 0.0.40
codegen_flags: <defaults>
</compile_context>

<pallas_src>
import functools

import jax
import jax.numpy as jnp
from jax.experimental import pallas as pl
from jax.experimental.pallas import tpu as pltpu


_LANE = 128
_COL_CANDIDATES = (8192, 4096, 2048, 1024, 512, 256, 128)
_TARGET_BLOCK_BYTES = 2 << 20     # ~2 MiB blocks: in+out, double-buffered ~8 MiB
_MIN_BLOCK_BYTES = 128 << 10      # don't shrink blocks below ~128 KiB for balance
_MIN_GRID_STEPS = 8               # keep both v7x TCs fed + DMA/compute overlap
_VMEM_LIMIT_BYTES = 32 << 20      # explicit scoped-VMEM request (fits all chips)


def _sublane_multiple(dtype):
    # Minimum packed sublane tile: 8 rows for 4-byte, 16 for 2-byte,
    # 32 for 1-byte dtypes.
    return max(8, 32 // jnp.dtype(dtype).itemsize)


def _round_up(v, m):
    return ((v + m - 1) // m) * m


@functools.lru_cache(maxsize=1)
def _bf16_compute_ok():
    # v6e (Trillium) and v7x have bf16 VPU/EUP; v5e/v5p and older do not.
    try:
        kind = jax.devices()[0].device_kind.lower()
    except Exception:  # pragma: no cover - defensive
        return False
    return not any(tag in kind for tag in ("v2", "v3", "v4", "v5"))


def _silu_kernel(x_ref, o_ref, *, compute_dtype):
    x = x_ref[...].astype(compute_dtype)
    # silu(x) = x * sigmoid(x) = 0.5*x*(1 + tanh(0.5*x)): one EUP op/elem.
    y = (0.5 * x) * (1.0 + jnp.tanh(0.5 * x))
    o_ref[...] = y.astype(o_ref.dtype)


def _cost(n, itemsize):
    return pl.CostEstimate(
        flops=4 * n,
        transcendentals=n,
        bytes_accessed=2 * n * itemsize,
    )


def _compiler_params():
    return pltpu.CompilerParams(
        dimension_semantics=("parallel",),
        vmem_limit_bytes=_VMEM_LIMIT_BYTES,
    )


def _pallas_silu_2d(x2d, tile_rows, compute_dtype):
    """SiLU on a (rows, cols) lane-dense view; cols is a multiple of 128."""
    rows, cols = x2d.shape
    itemsize = jnp.dtype(x2d.dtype).itemsize
    n = rows * cols
    return pl.pallas_call(
        functools.partial(_silu_kernel, compute_dtype=compute_dtype),
        out_shape=jax.ShapeDtypeStruct((rows, cols), x2d.dtype),
        grid_spec=pltpu.PrefetchScalarGridSpec(
            num_scalar_prefetch=0,
            grid=(pl.cdiv(rows, tile_rows),),  # last block may be partial (masked)
            in_specs=[pl.BlockSpec((tile_rows, cols), lambda i: (i, 0))],
            out_specs=pl.BlockSpec((tile_rows, cols), lambda i: (i, 0)),
        ),
        compiler_params=_compiler_params(),
        cost_estimate=_cost(n, itemsize),
    )(x2d)


def _pallas_silu_1d(flat, block_elems, compute_dtype):
    """SiLU over a flat array whose length is NOT a multiple of 128 (rare).

    Single kernel over the whole array: no prefix-slice copy, no concatenate;
    the final partial block is handled with masked stores by the pipeline.
    """
    n = flat.shape[0]
    itemsize = jnp.dtype(flat.dtype).itemsize
    return pl.pallas_call(
        functools.partial(_silu_kernel, compute_dtype=compute_dtype),
        out_shape=jax.ShapeDtypeStruct((n,), flat.dtype),
        grid_spec=pltpu.PrefetchScalarGridSpec(
            num_scalar_prefetch=0,
            grid=(pl.cdiv(n, block_elems),),
            in_specs=[pl.BlockSpec((block_elems,), lambda i: (i,))],
            out_specs=pl.BlockSpec((block_elems,), lambda i: (i,)),
        ),
        compiler_params=_compiler_params(),
        cost_estimate=_cost(n, itemsize),
    )(flat)


def _pick_cols(n, sub):
    # Widest lane-dense divisor that still leaves enough rows for
    # >= _MIN_GRID_STEPS balanced grid steps; otherwise the widest divisor.
    for c in _COL_CANDIDATES:
        if n % c == 0 and (n // c) >= _MIN_GRID_STEPS * sub:
            return c
    for c in _COL_CANDIDATES:
        if n % c == 0:
            return c
    return _LANE


def _pick_tile_rows(rows, cols, itemsize, sub):
    row_bytes = cols * itemsize
    # VMEM budget bound (~_TARGET_BLOCK_BYTES per block).
    tr_budget = max(sub, (_TARGET_BLOCK_BYTES // row_bytes) // sub * sub)
    # Balance bound: >= _MIN_GRID_STEPS roughly-equal steps, but keep each
    # block above ~_MIN_BLOCK_BYTES so per-step overhead stays negligible.
    tr_floor = max(sub, (_MIN_BLOCK_BYTES // row_bytes) // sub * sub)
    tr_balance = max(tr_floor, _round_up(pl.cdiv(rows, _MIN_GRID_STEPS), sub))
    tile_rows = min(tr_budget, tr_balance)
    # tile_rows == rows (full dim) is always legal even if not a sub multiple.
    return min(tile_rows, rows)


def pallas_silu(x):
    """Elementwise SiLU on an arbitrary-shaped array via a Pallas kernel."""
    orig_shape = x.shape
    dtype = x.dtype
    flat = x.reshape(-1)  # contiguous reshape: free
    n = flat.shape[0]
    if n == 0:
        return x

    itemsize = jnp.dtype(dtype).itemsize
    sub = _sublane_multiple(dtype)
    compute_dtype = (
        jnp.bfloat16 if (dtype == jnp.bfloat16 and _bf16_compute_ok()) else jnp.float32
    )

    if n % _LANE == 0:
        # Aligned hot path: lane-dense 2-D view, full-width unmasked stores.
        cols = _pick_cols(n, sub)
        rows = n // cols
        tile_rows = _pick_tile_rows(rows, cols, itemsize, sub)
        y = _pallas_silu_2d(flat.reshape(rows, cols), tile_rows, compute_dtype)
        return y.reshape(orig_shape)

    # Misaligned sizes (n % 128 != 0): rare for NN tensors.
    min_blk = sub * _LANE
    if n < 4 * min_blk:
        # Tiny misaligned array: not worth a kernel launch.
        xf = flat.astype(jnp.float32)
        return (xf * jax.nn.sigmoid(xf)).astype(dtype).reshape(orig_shape)
    blk = max(min_blk, min(_TARGET_BLOCK_BYTES // itemsize, n) // min_blk * min_blk)
    y = _pallas_silu_1d(flat, blk, compute_dtype)
    return y.reshape(orig_shape)


class FnModule:
    """JAX/Pallas equivalent of the PyTorch FnModule: forward(*input) = fn(*input)."""

    def __init__(self, fn):
        self.fn = fn

    def __call__(self, *inputs):
        return self.fn(*inputs)


if __name__ == "__main__":
    key = jax.random.PRNGKey(0)
    k0, k1, k2 = jax.random.split(key, 3)

    module = FnModule(pallas_silu)

    # Primary small NCHW input (typical conv-style usage).
    x = jax.random.normal(k0, (2, 4, 16, 16), dtype=jnp.float32)
    y = jax.block_until_ready(module(x))
    ref = x * jax.nn.sigmoid(x)
    assert y.shape == x.shape and y.dtype == x.dtype
    assert float(jnp.max(jnp.abs(y - ref))) < 1e-4

    # Larger f32 input: exercises multi-step grid + partial (masked) last block.
    x2 = jax.random.normal(k1, (4, 32, 56, 56), dtype=jnp.float32)
    y2 = jax.block_until_ready(module(x2))
    ref2 = x2 * jax.nn.sigmoid(x2)
    assert float(jnp.max(jnp.abs(y2 - ref2))) < 1e-4

    # bf16 input: exercises dtype-aware sublane tiling and (on v6e/v7x) the
    # native-bf16 compute path.  Tolerance ~3 bf16 ulp at |y|~4 (ulp = 1/32).
    x3 = jax.random.normal(k2, (2, 8, 24, 24), dtype=jnp.bfloat16)
    y3 = jax.block_until_ready(module(x3))
    x3f = x3.astype(jnp.float32)
    ref3 = (x3f * jax.nn.sigmoid(x3f)).astype(jnp.bfloat16)
    assert y3.shape == x3.shape and y3.dtype == x3.dtype
    assert float(
        jnp.max(jnp.abs(y3.astype(jnp.float32) - ref3.astype(jnp.float32)))
    ) < 1e-1

    print("KERNEL_OK")
</pallas_src>

<mosaic_0001>
module attributes {stable_mosaic.version = 11 : i64} {
  func.func @_silu_kernel(%arg0: i32, %arg1: memref<1x2048xf32, #tpu.memory_space<vmem>>, %arg2: memref<1x2048xf32, #tpu.memory_space<vmem>>) attributes {dimension_semantics = [#tpu.dimension_semantics<parallel>], iteration_bounds = array<i64: 1>, scalar_prefetch = 0 : i64, scratch_operands = 0 : i64, tpu.core_type = #tpu.core_type<tc>, window_params = [{transform_indices = @transform_0, window_bounds = array<i64: 1, 2048>}, {transform_indices = @transform_1, window_bounds = array<i64: 1, 2048>}]} {
    %c0 = arith.constant 0 : index
    %c0_0 = arith.constant 0 : index
    %0 = vector.load %arg1[%c0, %c0_0] : memref<1x2048xf32, #tpu.memory_space<vmem>>, vector<1x2048xf32>
    %cst = arith.constant 5.000000e-01 : f32
    %1 = vector.broadcast %cst : f32 to vector<1x2048xf32>
    %2 = arith.mulf %1, %0 : vector<1x2048xf32>
    %cst_1 = arith.constant 5.000000e-01 : f32
    %3 = vector.broadcast %cst_1 : f32 to vector<1x2048xf32>
    %4 = arith.mulf %3, %0 : vector<1x2048xf32>
    %5 = math.tanh %4 : vector<1x2048xf32>
    %cst_2 = arith.constant 1.000000e+00 : f32
    %6 = vector.broadcast %cst_2 : f32 to vector<1x2048xf32>
    %7 = arith.addf %6, %5 : vector<1x2048xf32>
    %8 = arith.mulf %2, %7 : vector<1x2048xf32>
    %c0_3 = arith.constant 0 : index
    %c0_4 = arith.constant 0 : index
    %9 = vector.load %arg2[%c0_3, %c0_4] : memref<1x2048xf32, #tpu.memory_space<vmem>>, vector<1x2048xf32>
    tpu.vector_store %arg2[%c0_3, %c0_4], %8 {strides = array<i32>} : memref<1x2048xf32, #tpu.memory_space<vmem>>, vector<1x2048xf32>,
    return
  }
  func.func @transform_0(%arg0: i32) -> (i32, i32) {
    %c0_i32 = arith.constant 0 : i32
    %c0_i32_0 = arith.constant 0 : i32
    return %arg0, %c0_i32 : i32, i32
  }
  func.func @transform_1(%arg0: i32) -> (i32, i32) {
    %c0_i32 = arith.constant 0 : i32
    %c0_i32_0 = arith.constant 0 : i32
    return %arg0, %c0_i32 : i32, i32
  }
}

</mosaic_0001>

<llo_original>
// kernel: tpu_custom_call.1
$region0: #{tpu_custom_call.1}
  #allocation0 [shape = 'u32[]', space=smem, size = 0x4, offset = 0x4, fixed_abs, tag = 'smem constant byte address 0x4 - core index']
  #allocation1 [shape = 'u32[72,128]{1,0:T(1,128)}', space=vmem, size = 0x9000, scoped, tag = 'internal scratch']
  %s0 = inlined_call_operand.hbm [shape: f32[1,2048], index: 0, kind: input, shape index: {}]
  %s1 = inlined_call_operand.hbm [shape: f32[1,2048], index: 1, kind: output, shape index: {}]
  %s2 = sld [smem:[#allocation0]]
  $region18: #{tpu_custom_call.1} parent=0
    _
  %s4 = ssub.s32 1, %s2
  %s5 = scalar_select 0, %s4, %s2
  $region1: #{tpu_custom_call.1} parent=0
    #allocation2 [shape = 'u8[8192]{0}', space=vmem, size = 0x2000, scoped, tag = 'input window, operand 0, single buffered']
    #allocation3 [shape = 's32[1]{0}', space=sflag, size = 0x4, scoped, tag = 'scoped memory for tpu_custom_call.1']
    #allocation4 [shape = 's32[1]{0}', space=sflag, size = 0x4, scoped, tag = 'scoped memory for tpu_custom_call.1']
    #allocation5 [shape = 'u8[8192]{0}', space=vmem, size = 0x2000, scoped, tag = 'output window, operand 0, single buffered']
    %6 = vsyncpa [#allocation3], 0
    %7 = vsyncpa [#allocation4], 0
    // Predicated region
    $region2: #{tpu_custom_call.1} parent=1 // pred_check
      _
    $region3: #{tpu_custom_call.1} parent=1 // pred_check_branch
      %9 = sbr.rel (0) target = $region5
    $region4: #{tpu_custom_call.1} parent=1 // pred_region
      %11 = vsyncadd [#allocation3], 0
      %s13 = sshll.u32 %s0, 4
      %s14 = int_to_ptr.hbm [resolvable:$true] %s13
      %s15 = sshll.u32 [#allocation2], 4
      %s16 = int_to_ptr.vmem [resolvable:$true] %s15
      %18 = dma.hbm_to_vmem [thread:$0]  %s14, 256, %s16, [#allocation3]
    $region5: #{tpu_custom_call.1} parent=1 // pred_fallthru
      _
    // Predicated region
    $region6: #{tpu_custom_call.1} parent=1 // pred_check
      _
    $region7: #{tpu_custom_call.1} parent=1 // pred_check_branch
      %20 = sbr.rel (0) target = $region9
    $region8: #{tpu_custom_call.1} parent=1 // pred_region
      %22 = dma.done [#allocation3], 256
    $region9: #{tpu_custom_call.1} parent=1 // pred_fallthru
      _
    %v23 = vld [vmem:[#allocation2] sm:$0xff]
    %v24 = vld [vmem:[#allocation2 + $0x8] sm:$0xff]
    %v25 = vmul.f32 %v23, 0.5
    %v26 = vmul.f32 %v24, 0.5
    %v27 = vtanh.pop %v25
    %v28 = vtanh.pop %v26
    %v29 = vadd.f32 %v27, 1.0
    %v30 = vadd.f32 %v28, 1.0
    %v31 = vmul.f32 %v25, %v29
    %v32 = vmul.f32 %v26, %v30
    %33 = vst [vmem:[#allocation5] sm:$0xff] %v31
    %34 = vst [vmem:[#allocation5 + $0x8] sm:$0xff] %v32
    // Predicated region
    $region10: #{tpu_custom_call.1} parent=1 // pred_check
      _
    $region11: #{tpu_custom_call.1} parent=1 // pred_check_branch
      %36 = sbr.rel (0) target = $region13
    $region12: #{tpu_custom_call.1} parent=1 // pred_region
      %38 = vsyncadd [#allocation4], 0
      %s40 = sshll.u32 [#allocation5], 4
      %s41 = int_to_ptr.vmem [resolvable:$true] %s40
      %s42 = sshll.u32 %s1, 4
      %s43 = int_to_ptr.hbm [resolvable:$true] %s42
      %45 = dma.vmem_to_hbm [thread:$0]  %s41, 256, %s43, [#allocation4]
    $region13: #{tpu_custom_call.1} parent=1 // pred_fallthru
      _
    // Predicated region
    $region14: #{tpu_custom_call.1} parent=1 // pred_check
      _
    $region15: #{tpu_custom_call.1} parent=1 // pred_check_branch
      %47 = sbr.rel (0) target = $region17
    $region16: #{tpu_custom_call.1} parent=1 // pred_region
      %49 = dma.done [#allocation4], 256
    $region17: #{tpu_custom_call.1} parent=1 // pred_fallthru
      _
    %50 = vsyncpa [#allocation3], 1
    %51 = vsyncpa [#allocation4], 1

</llo_original>
